<compile_context>
chip_gen: v5e
topology: v5e:2x2
jax: 0.10.0
libtpu: 0.0.40
codegen_flags: <defaults>
</compile_context>

<pallas_src>
import jax
import jax.numpy as jnp
from jax.experimental import pallas as pl
from jax.experimental.pallas import tpu as pltpu

INPUT_DIM = 14
HIDDEN_DIM = 20
NUM_HEADS = 6     # six scalar output heads
OUT_PAD = 8       # fused-head slab width (heads live in columns 0..5)


def weather_kernel(x_ref, w1_ref, b1_ref, w2_ref, b2_ref, wh_ref, bh_ref, out_ref):
    # One (TB, 14) batch tile: full MLP on the MXU, bias/ReLU on the VPU.
    x = x_ref[...]
    h1 = jnp.dot(x, w1_ref[...], preferred_element_type=jnp.float32) + b1_ref[...]
    h1 = jnp.maximum(h1, 0.0)                       # ReLU
    h2 = jnp.dot(h1, w2_ref[...], preferred_element_type=jnp.float32) + b2_ref[...]
    h2 = jnp.maximum(h2, 0.0)                       # ReLU
    # (TB, 8) fused-head result; columns >= 6 are exactly zero by construction.
    out = jnp.dot(h2, wh_ref[...], preferred_element_type=jnp.float32) + bh_ref[...]
    out_ref[...] = out.astype(out_ref.dtype)


def _round_up(n, m):
    return ((n + m - 1) // m) * m


def _choose_tile(B, block_b):
    """Pick the batch tile size.

    * B <= 1024: one block whose second-last dim equals the full array dim
      (always a legal block shape, no padding needed).
    * B  > 1024: at least 2 tiles (v7x megacore sharding + DMA/compute
      overlap), each a multiple of 8 rows, capped at block_b rows to stay
      inside the scoped-VMEM default on every chip.
    """
    if B <= 1024:
        return B
    return min(block_b, _round_up(pl.cdiv(B, 2), 8))


def weather_forward_fused(x, prepared_params, *, block_b=4096):
    """x: (B, INPUT_DIM) f32 -> (B, OUT_PAD) f32; columns 0..5 are the heads in
    order (wind_direction, pressure, wind_speed, temperature, visibility,
    weather_type); columns 6..7 are zero.  No extra pad/slice passes."""
    w1, b1, w2, b2, wh_pad, bh_pad = prepared_params
    B = x.shape[0]

    tb = _choose_tile(B, block_b)
    n_tiles = pl.cdiv(B, tb)

    weight_bytes = 4 * (INPUT_DIM * HIDDEN_DIM + HIDDEN_DIM
                        + HIDDEN_DIM * HIDDEN_DIM + HIDDEN_DIM
                        + HIDDEN_DIM * OUT_PAD + OUT_PAD)
    cost = pl.CostEstimate(
        flops=2 * B * (INPUT_DIM * HIDDEN_DIM
                       + HIDDEN_DIM * HIDDEN_DIM
                       + HIDDEN_DIM * NUM_HEADS),
        transcendentals=0,
        # Real traffic: x read + full (B, OUT_PAD) writeback + resident weights.
        bytes_accessed=4 * B * (INPUT_DIM + OUT_PAD) + weight_bytes,
    )

    out = pl.pallas_call(
        weather_kernel,
        out_shape=jax.ShapeDtypeStruct((B, OUT_PAD), jnp.float32),
        grid=(n_tiles,),
        in_specs=[
            pl.BlockSpec((tb, INPUT_DIM), lambda i: (i, 0)),          # x tile streams
            pl.BlockSpec((INPUT_DIM, HIDDEN_DIM), lambda i: (0, 0)),  # weights stay VMEM-resident
            pl.BlockSpec((1, HIDDEN_DIM), lambda i: (0, 0)),
            pl.BlockSpec((HIDDEN_DIM, HIDDEN_DIM), lambda i: (0, 0)),
            pl.BlockSpec((1, HIDDEN_DIM), lambda i: (0, 0)),
            pl.BlockSpec((HIDDEN_DIM, OUT_PAD), lambda i: (0, 0)),
            pl.BlockSpec((1, OUT_PAD), lambda i: (0, 0)),
        ],
        out_specs=pl.BlockSpec((tb, OUT_PAD), lambda i: (i, 0)),
        compiler_params=pltpu.CompilerParams(
            dimension_semantics=("parallel",)),   # megacore sharding on v7x
        cost_estimate=cost,
    )(x, w1, b1, w2, b2, wh_pad, bh_pad)

    return out


def weather_forward(x, prepared_params, *, block_b=4096):
    """Matches the PyTorch module's forward: returns the 6-tuple of (B, 1) arrays
    (wind_direction, pressure, wind_speed, temperature, visibility, weather_type).
    Prefer weather_forward_fused() if the consumer can index the fused output;
    this split is an extra (cheap) XLA pass over the 32 B/row result."""
    fused = weather_forward_fused(x, prepared_params, block_b=block_b)
    return tuple(fused[:, i:i + 1] for i in range(NUM_HEADS))


def prepare_params(raw_params):
    """One-time prep: pad the fused head weight/bias from 6 to OUT_PAD columns
    so the kernel's output block is (tb, 8).  Hoisted out of the forward path."""
    w1, b1, w2, b2, wh, bh = raw_params
    wh_pad = jnp.zeros((HIDDEN_DIM, OUT_PAD), jnp.float32).at[:, :NUM_HEADS].set(wh)
    bh_pad = jnp.zeros((1, OUT_PAD), jnp.float32).at[:, :NUM_HEADS].set(bh)
    return (w1, b1, w2, b2, wh_pad, bh_pad)


def init_params(key):
    """Deterministic init mimicking nn.Linear's U(-1/sqrt(fan_in), 1/sqrt(fan_in)).
    The six per-head Linear(hidden, 1) layers are fused along the output axis in
    the return-tuple column order."""
    ks = jax.random.split(key, 6)

    def linear(kw, kb, fan_in, fan_out):
        bound = 1.0 / jnp.sqrt(fan_in)
        w = jax.random.uniform(kw, (fan_in, fan_out), jnp.float32, -bound, bound)
        b = jax.random.uniform(kb, (1, fan_out), jnp.float32, -bound, bound)
        return w, b

    w1, b1 = linear(ks[0], ks[1], INPUT_DIM, HIDDEN_DIM)
    w2, b2 = linear(ks[2], ks[3], HIDDEN_DIM, HIDDEN_DIM)
    wh, bh = linear(ks[4], ks[5], HIDDEN_DIM, NUM_HEADS)
    return (w1, b1, w2, b2, wh, bh)


def _reference_fused(x, raw_params):
    """Pure-JAX reference of the PyTorch forward (fused heads, 6 columns)."""
    w1, b1, w2, b2, wh, bh = raw_params
    h = jnp.maximum(x @ w1 + b1, 0.0)
    h = jnp.maximum(h @ w2 + b2, 0.0)
    return h @ wh + bh


if __name__ == "__main__":
    key = jax.random.PRNGKey(0)
    kx1, kx2, kp = jax.random.split(key, 3)
    raw_params = init_params(kp)
    params = prepare_params(raw_params)

    # Small batch: single grid step (latency path), full-dim block shapes.
    B_small = 8
    x_small = jax.random.normal(kx1, (B_small, INPUT_DIM), jnp.float32)
    fused_small = jax.block_until_ready(weather_forward_fused(x_small, params))
    assert fused_small.shape == (B_small, OUT_PAD), fused_small.shape
    ref_small = _reference_fused(x_small, raw_params)
    assert jnp.allclose(fused_small[:, :NUM_HEADS], ref_small, atol=1e-5, rtol=1e-5)
    # Pad columns must be exactly zero.
    assert jnp.all(fused_small[:, NUM_HEADS:] == 0.0)
    # Tuple-returning wrapper matches the PyTorch return signature.
    outs_small = weather_forward(x_small, params)
    assert len(outs_small) == NUM_HEADS and all(o.shape == (B_small, 1) for o in outs_small)

    # Larger batch that is NOT a multiple of the tile: exercises the multi-tile
    # path (>=2 grid steps) and the ragged last block (partial-block masking,
    # no jnp.pad and no post-kernel slice pass).
    B_big = 1500
    x_big = jax.random.normal(kx2, (B_big, INPUT_DIM), jnp.float32)
    fused_big = jax.block_until_ready(weather_forward_fused(x_big, params, block_b=512))
    assert fused_big.shape == (B_big, OUT_PAD), fused_big.shape
    ref_big = _reference_fused(x_big, raw_params)
    assert jnp.allclose(fused_big[:, :NUM_HEADS], ref_big, atol=1e-4, rtol=1e-4)

    print("KERNEL_OK")
</pallas_src>

<mosaic_0001>
module attributes {stable_mosaic.version = 11 : i64} {
  func.func @weather_kernel(%arg0: i32, %arg1: memref<8x14xf32, #tpu.memory_space<vmem>>, %arg2: memref<14x20xf32, #tpu.memory_space<vmem>>, %arg3: memref<1x20xf32, #tpu.memory_space<vmem>>, %arg4: memref<20x20xf32, #tpu.memory_space<vmem>>, %arg5: memref<1x20xf32, #tpu.memory_space<vmem>>, %arg6: memref<20x8xf32, #tpu.memory_space<vmem>>, %arg7: memref<1x8xf32, #tpu.memory_space<vmem>>, %arg8: memref<8x8xf32, #tpu.memory_space<vmem>>) attributes {dimension_semantics = [#tpu.dimension_semantics<parallel>], iteration_bounds = array<i64: 1>, scalar_prefetch = 0 : i64, scratch_operands = 0 : i64, tpu.core_type = #tpu.core_type<tc>, window_params = [{transform_indices = @transform_0, window_bounds = array<i64: 8, 14>}, {pipeline_mode = #tpu.pipeline_mode<synchronous>, transform_indices = @transform_1, window_bounds = array<i64: 14, 20>}, {pipeline_mode = #tpu.pipeline_mode<synchronous>, transform_indices = @transform_2, window_bounds = array<i64: 1, 20>}, {pipeline_mode = #tpu.pipeline_mode<synchronous>, transform_indices = @transform_3, window_bounds = array<i64: 20, 20>}, {pipeline_mode = #tpu.pipeline_mode<synchronous>, transform_indices = @transform_4, window_bounds = array<i64: 1, 20>}, {pipeline_mode = #tpu.pipeline_mode<synchronous>, transform_indices = @transform_5, window_bounds = array<i64: 20, 8>}, {pipeline_mode = #tpu.pipeline_mode<synchronous>, transform_indices = @transform_6, window_bounds = array<i64: 1, 8>}, {transform_indices = @transform_7, window_bounds = array<i64: 8, 8>}]} {
    %c0 = arith.constant 0 : index
    %c0_0 = arith.constant 0 : index
    %0 = vector.load %arg1[%c0, %c0_0] : memref<8x14xf32, #tpu.memory_space<vmem>>, vector<8x14xf32>
    %c0_1 = arith.constant 0 : index
    %c0_2 = arith.constant 0 : index
    %1 = vector.load %arg2[%c0_1, %c0_2] : memref<14x20xf32, #tpu.memory_space<vmem>>, vector<14x20xf32>
    %cst = arith.constant dense<0.000000e+00> : vector<8x20xf32>
    %2 = tpu.matmul %0, %1, %cst {dimension_numbers = #tpu.dot_dimension_numbers<[1], [0], [0], [1], [0, 0, 1, 1], [], []>} : vector<8x14xf32>, vector<14x20xf32>, vector<8x20xf32> -> vector<8x20xf32>
    %c0_3 = arith.constant 0 : index
    %c0_4 = arith.constant 0 : index
    %3 = vector.load %arg3[%c0_3, %c0_4] : memref<1x20xf32, #tpu.memory_space<vmem>>, vector<1x20xf32>
    %4 = vector.broadcast %3 : vector<1x20xf32> to vector<8x20xf32>
    %5 = arith.addf %2, %4 : vector<8x20xf32>
    %cst_5 = arith.constant 0.000000e+00 : f32
    %6 = vector.broadcast %cst_5 : f32 to vector<8x20xf32>
    %7 = arith.maximumf %5, %6 : vector<8x20xf32>
    %c0_6 = arith.constant 0 : index
    %c0_7 = arith.constant 0 : index
    %8 = vector.load %arg4[%c0_6, %c0_7] : memref<20x20xf32, #tpu.memory_space<vmem>>, vector<20x20xf32>
    %cst_8 = arith.constant dense<0.000000e+00> : vector<8x20xf32>
    %9 = tpu.matmul %7, %8, %cst_8 {dimension_numbers = #tpu.dot_dimension_numbers<[1], [0], [0], [1], [0, 0, 1, 1], [], []>} : vector<8x20xf32>, vector<20x20xf32>, vector<8x20xf32> -> vector<8x20xf32>
    %c0_9 = arith.constant 0 : index
    %c0_10 = arith.constant 0 : index
    %10 = vector.load %arg5[%c0_9, %c0_10] : memref<1x20xf32, #tpu.memory_space<vmem>>, vector<1x20xf32>
    %11 = vector.broadcast %10 : vector<1x20xf32> to vector<8x20xf32>
    %12 = arith.addf %9, %11 : vector<8x20xf32>
    %cst_11 = arith.constant 0.000000e+00 : f32
    %13 = vector.broadcast %cst_11 : f32 to vector<8x20xf32>
    %14 = arith.maximumf %12, %13 : vector<8x20xf32>
    %c0_12 = arith.constant 0 : index
    %c0_13 = arith.constant 0 : index
    %15 = vector.load %arg6[%c0_12, %c0_13] : memref<20x8xf32, #tpu.memory_space<vmem>>, vector<20x8xf32>
    %cst_14 = arith.constant dense<0.000000e+00> : vector<8x8xf32>
    %16 = tpu.matmul %14, %15, %cst_14 {dimension_numbers = #tpu.dot_dimension_numbers<[1], [0], [0], [1], [0, 0, 1, 1], [], []>} : vector<8x20xf32>, vector<20x8xf32>, vector<8x8xf32> -> vector<8x8xf32>
    %c0_15 = arith.constant 0 : index
    %c0_16 = arith.constant 0 : index
    %17 = vector.load %arg7[%c0_15, %c0_16] : memref<1x8xf32, #tpu.memory_space<vmem>>, vector<1x8xf32>
    %18 = vector.broadcast %17 : vector<1x8xf32> to vector<8x8xf32>
    %19 = arith.addf %16, %18 : vector<8x8xf32>
    %c0_17 = arith.constant 0 : index
    %c0_18 = arith.constant 0 : index
    %20 = vector.load %arg8[%c0_17, %c0_18] : memref<8x8xf32, #tpu.memory_space<vmem>>, vector<8x8xf32>
    tpu.vector_store %arg8[%c0_17, %c0_18], %19 {strides = array<i32>} : memref<8x8xf32, #tpu.memory_space<vmem>>, vector<8x8xf32>,
    return
  }
  func.func @transform_0(%arg0: i32) -> (i32, i32) {
    %c0_i32 = arith.constant 0 : i32
    %c0_i32_0 = arith.constant 0 : i32
    return %arg0, %c0_i32 : i32, i32
  }
  func.func @transform_1(%arg0: i32) -> (i32, i32) {
    %c0_i32 = arith.constant 0 : i32
    %c0_i32_0 = arith.constant 0 : i32
    %c0_i32_1 = arith.constant 0 : i32
    return %c0_i32, %c0_i32_0 : i32, i32
  }
  func.func @transform_2(%arg0: i32) -> (i32, i32) {
    %c0_i32 = arith.constant 0 : i32
    %c0_i32_0 = arith.constant 0 : i32
    %c0_i32_1 = arith.constant 0 : i32
    return %c0_i32, %c0_i32_0 : i32, i32
  }
  func.func @transform_3(%arg0: i32) -> (i32, i32) {
    %c0_i32 = arith.constant 0 : i32
    %c0_i32_0 = arith.constant 0 : i32
    %c0_i32_1 = arith.constant 0 : i32
    return %c0_i32, %c0_i32_0 : i32, i32
  }
  func.func @transform_4(%arg0: i32) -> (i32, i32) {
    %c0_i32 = arith.constant 0 : i32
    %c0_i32_0 = arith.constant 0 : i32
    %c0_i32_1 = arith.constant 0 : i32
    return %c0_i32, %c0_i32_0 : i32, i32
  }
  func.func @transform_5(%arg0: i32) -> (i32, i32) {
    %c0_i32 = arith.constant 0 : i32
    %c0_i32_0 = arith.constant 0 : i32
    %c0_i32_1 = arith.constant 0 : i32
    return %c0_i32, %c0_i32_0 : i32, i32
  }
  func.func @transform_6(%arg0: i32) -> (i32, i32) {
    %c0_i32 = arith.constant 0 : i32
    %c0_i32_0 = arith.constant 0 : i32
    %c0_i32_1 = arith.constant 0 : i32
    return %c0_i32, %c0_i32_0 : i32, i32
  }
  func.func @transform_7(%arg0: i32) -> (i32, i32) {
    %c0_i32 = arith.constant 0 : i32
    %c0_i32_0 = arith.constant 0 : i32
    return %arg0, %c0_i32 : i32, i32
  }
}

</mosaic_0001>

<llo_original>
// kernel: tpu_custom_call.1
$region0: #{tpu_custom_call.1}
  #allocation0 [shape = 'u32[]', space=smem, size = 0x4, offset = 0x4, fixed_abs, tag = 'smem constant byte address 0x4 - core index']
  #allocation1 [shape = 'u32[72,128]{1,0:T(1,128)}', space=vmem, size = 0x9000, scoped, tag = 'internal scratch']
  %s0 = inlined_call_operand.vmem [shape: f32[8,14], index: 0, kind: input, shape index: {}]
  %s1 = inlined_call_operand.hbm [shape: f32[14,20], index: 1, kind: input, shape index: {}]
  %s2 = inlined_call_operand.vmem [shape: f32[1,20], index: 2, kind: input, shape index: {}]
  %s3 = inlined_call_operand.vmem [shape: f32[20,20], index: 3, kind: input, shape index: {}]
  %s4 = inlined_call_operand.vmem [shape: f32[1,20], index: 4, kind: input, shape index: {}]
  %s5 = inlined_call_operand.vmem [shape: f32[20,8], index: 5, kind: input, shape index: {}]
  %s6 = inlined_call_operand.vmem [shape: f32[1,8], index: 6, kind: input, shape index: {}]
  %s7 = inlined_call_operand.hbm [shape: f32[8,8], index: 7, kind: output, shape index: {}]
  %s8 = sld [smem:[#allocation0]]
  $region42: #{tpu_custom_call.1} parent=0
    _
  %s10 = ssub.s32 1, %s8
  %s11 = scalar_select 0, %s10, %s8
  $region1: #{tpu_custom_call.1} parent=0
    #allocation2 [shape = 'u8[8192]{0}', space=vmem, size = 0x2000, scoped, tag = 'input window, operand 1, single buffered']
    #allocation3 [shape = 's32[1]{0}', space=sflag, size = 0x4, scoped, tag = 'scoped memory for tpu_custom_call.1']
    #allocation4 [shape = 's32[1]{0}', space=sflag, size = 0x4, scoped, tag = 'scoped memory for tpu_custom_call.1']
    #allocation5 [shape = 'u8[4096]{0}', space=vmem, size = 0x1000, scoped, tag = 'output window, operand 0, single buffered']
    %12 = vsyncpa [#allocation3], 0
    %13 = vsyncpa [#allocation4], 0
    // Predicated region
    $region2: #{tpu_custom_call.1} parent=1 // pred_check
      _
    $region3: #{tpu_custom_call.1} parent=1 // pred_check_branch
      %15 = sbr.rel (0) target = $region5
    $region4: #{tpu_custom_call.1} parent=1 // pred_region
      _
    $region5: #{tpu_custom_call.1} parent=1 // pred_fallthru
      _
    // Predicated region
    $region6: #{tpu_custom_call.1} parent=1 // pred_check
      _
    $region7: #{tpu_custom_call.1} parent=1 // pred_check_branch
      %17 = sbr.rel (0) target = $region9
    $region8: #{tpu_custom_call.1} parent=1 // pred_region
      %19 = vsyncadd [#allocation3], 0
      %s20 = sshll.u32 %s1, 4
      %s21 = int_to_ptr.hbm [resolvable:$true] %s20
      %s22 = sshll.u32 [#allocation2], 4
      %s23 = int_to_ptr.vmem [resolvable:$true] %s22
      %28 = dma.hbm_to_vmem [thread:$0]  %s21, 256, %s23, [#allocation3], 128, 128, 8
    $region9: #{tpu_custom_call.1} parent=1 // pred_fallthru
      _
    // Predicated region
    $region10: #{tpu_custom_call.1} parent=1 // pred_check
      _
    $region11: #{tpu_custom_call.1} parent=1 // pred_check_branch
      %30 = sbr.rel (0) target = $region13
    $region12: #{tpu_custom_call.1} parent=1 // pred_region
      _
    $region13: #{tpu_custom_call.1} parent=1 // pred_fallthru
      _
    // Predicated region
    $region14: #{tpu_custom_call.1} parent=1 // pred_check
      _
    $region15: #{tpu_custom_call.1} parent=1 // pred_check_branch
      %32 = sbr.rel (0) target = $region17
    $region16: #{tpu_custom_call.1} parent=1 // pred_region
      _
    $region17: #{tpu_custom_call.1} parent=1 // pred_fallthru
      _
    // Predicated region
    $region18: #{tpu_custom_call.1} parent=1 // pred_check
      _
    $region19: #{tpu_custom_call.1} parent=1 // pred_check_branch
      %34 = sbr.rel (0) target = $region21
    $region20: #{tpu_custom_call.1} parent=1 // pred_region
      _
    $region21: #{tpu_custom_call.1} parent=1 // pred_fallthru
      _
    // Predicated region
    $region22: #{tpu_custom_call.1} parent=1 // pred_check
      _
    $region23: #{tpu_custom_call.1} parent=1 // pred_check_branch
      %36 = sbr.rel (0) target = $region25
    $region24: #{tpu_custom_call.1} parent=1 // pred_region
      _
    $region25: #{tpu_custom_call.1} parent=1 // pred_fallthru
      _
    // Predicated region
    $region26: #{tpu_custom_call.1} parent=1 // pred_check
      _
    $region27: #{tpu_custom_call.1} parent=1 // pred_check_branch
      %38 = sbr.rel (0) target = $region29
    $region28: #{tpu_custom_call.1} parent=1 // pred_region
      _
    $region29: #{tpu_custom_call.1} parent=1 // pred_fallthru
      _
    // Predicated region
    $region30: #{tpu_custom_call.1} parent=1 // pred_check
      _
    $region31: #{tpu_custom_call.1} parent=1 // pred_check_branch
      %40 = sbr.rel (0) target = $region33
    $region32: #{tpu_custom_call.1} parent=1 // pred_region
      %42 = dma.done [#allocation3], 256
    $region33: #{tpu_custom_call.1} parent=1 // pred_fallthru
      _
    %v43 = vld [vmem:[%s0] sm:$0xff]
    %v44 = vld [vmem:[#allocation2] sm:$0xff]
    %v45 = vld [vmem:[#allocation2 + $0x8] sm:$0x3f]
    %v46 = vld [vmem:[%s2] sm:$0x1]
    %v48 = vperm.slane %v46, 0
    %vm50 = vcmask 113664
    %v52 = vsel %vm50, %v43, 0
    %vm54 = vcmask 1045504
    %v56 = vsel %vm54, %v45, 0
    %58 = vmatpush.msra.mxu0 0.0
    %59 = vmatpush.msra.mxu0 0.0
    %60 = vmatpush.msra.mxu0 0.0
    %61 = vmatpush.msra.mxu0 0.0
    %62 = vmatpush.msra.mxu0 0.0
    %63 = vmatpush.msra.mxu0 0.0
    %64 = vmatpush.msra.mxu0 0.0
    %65 = vmatpush.msra.mxu0 0.0
    %66 = vmatpush.msra.mxu0 0.0
    %67 = vmatpush.msra.mxu0 0.0
    %68 = vmatpush.msra.mxu0 0.0
    %69 = vmatpush.msra.mxu0 0.0
    %70 = vmatpush.msra.mxu0 0.0
    %71 = vmatpush.msra.mxu0 0.0
    %72 = vmatpush.msra.mxu0 %v56
    %73 = vmatpush.msra.mxu0 %v44
    %74 = vmatmul.f32.gmra.mxu0 %v52
    %v75 = vpop.f32.mrf.mxu0
    %v76 = vadd.f32 %v48, %v75
    %77 = vdwg.mxu0
    %v78 = vmax.f32 %v76, 0.0
    %v79 = vld [vmem:[%s3] sm:$0xff]
    %v80 = vld [vmem:[%s3 + $0x8] sm:$0xff]
    %v81 = vld [vmem:[%s3 + $0x10] sm:$0xf]
    %v82 = vld [vmem:[%s4] sm:$0x1]
    %v84 = vperm.slane %v82, 0
    %vm86 = vcmask 162816
    %v88 = vsel %vm86, %v78, 0
    %vm90 = vcmask 1043456
    %v92 = vsel %vm90, %v81, 0
    %94 = vmatpush.msra.mxu0 0.0
    %95 = vmatpush.msra.mxu0 0.0
    %96 = vmatpush.msra.mxu0 0.0
    %97 = vmatpush.msra.mxu0 0.0
    %98 = vmatpush.msra.mxu0 0.0
    %99 = vmatpush.msra.mxu0 0.0
    %100 = vmatpush.msra.mxu0 0.0
    %101 = vmatpush.msra.mxu0 0.0
    %102 = vmatpush.msra.mxu0 0.0
    %103 = vmatpush.msra.mxu0 0.0
    %104 = vmatpush.msra.mxu0 0.0
    %105 = vmatpush.msra.mxu0 0.0
    %106 = vmatpush.msra.mxu0 0.0
    %107 = vmatpush.msra.mxu0 %v92
    %108 = vmatpush.msra.mxu0 %v80
    %109 = vmatpush.msra.mxu0 %v79
    %110 = vmatmul.f32.gmra.mxu0 %v88
    %v111 = vpop.f32.mrf.mxu0
    %v112 = vadd.f32 %v84, %v111
    %113 = vdwg.mxu0
    %v114 = vmax.f32 %v112, 0.0
    %v115 = vld [vmem:[%s5] sm:$0xff]
    %v116 = vld [vmem:[%s5 + $0x8] sm:$0xff]
    %v117 = vld [vmem:[%s5 + $0x10] sm:$0xf]
    %v118 = vld [vmem:[%s6] sm:$0x1]
    %v120 = vperm.slane %v118, 0
    %v123 = vsel %vm86, %v114, 0
    %v126 = vsel %vm90, %v117, 0
    %128 = vmatpush.msra.mxu0 0.0
    %129 = vmatpush.msra.mxu0 0.0
    %130 = vmatpush.msra.mxu0 0.0
    %131 = vmatpush.msra.mxu0 0.0
    %132 = vmatpush.msra.mxu0 0.0
    %133 = vmatpush.msra.mxu0 0.0
    %134 = vmatpush.msra.mxu0 0.0
    %135 = vmatpush.msra.mxu0 0.0
    %136 = vmatpush.msra.mxu0 0.0
    %137 = vmatpush.msra.mxu0 0.0
    %138 = vmatpush.msra.mxu0 0.0
    %139 = vmatpush.msra.mxu0 0.0
    %140 = vmatpush.msra.mxu0 0.0
    %141 = vmatpush.msra.mxu0 %v126
    %142 = vmatpush.msra.mxu0 %v116
    %143 = vmatpush.msra.mxu0 %v115
    %144 = vmatmul.f32.gmra.mxu0 %v123
    %v145 = vpop.f32.mrf.mxu0
    %v146 = vadd.f32 %v120, %v145
    %147 = vdwg.mxu0
    %vm148 = vcmask 64512
    %149 = vst.msk [vmem:[#allocation5] sm:$0xff] %vm148, %v146
    // Predicated region
    $region34: #{tpu_custom_call.1} parent=1 // pred_check
      _
    $region35: #{tpu_custom_call.1} parent=1 // pred_check_branch
      %151 = sbr.rel (0) target = $region37
    $region36: #{tpu_custom_call.1} parent=1 // pred_region
      %153 = vsyncadd [#allocation4], 0
      %s155 = sshll.u32 [#allocation5], 4
      %s156 = int_to_ptr.vmem [resolvable:$true] %s155
      %s157 = sshll.u32 %s7, 4
      %s158 = int_to_ptr.hbm [resolvable:$true] %s157
      %160 = dma.vmem_to_hbm [thread:$0]  %s156, 128, %s158, [#allocation4]
    $region37: #{tpu_custom_call.1} parent=1 // pred_fallthru
      _
    // Predicated region
    $region38: #{tpu_custom_call.1} parent=1 // pred_check
      _
    $region39: #{tpu_custom_call.1} parent=1 // pred_check_branch
      %162 = sbr.rel (0) target = $region41
    $region40: #{tpu_custom_call.1} parent=1 // pred_region
      %164 = dma.done [#allocation4], 128
    $region41: #{tpu_custom_call.1} parent=1 // pred_fallthru
      _
    %165 = vsyncpa [#allocation3], 1
    %166 = vsyncpa [#allocation4], 1

</llo_original>
